<compile_context>
chip_gen: v7x
topology: tpu7x:2x2x1
jax: 0.10.0
libtpu: 0.0.40
codegen_flags: <defaults>
</compile_context>

<pallas_src>
import jax
import jax.numpy as jnp
from jax import lax
from jax.experimental import pallas as pl
from jax.experimental.pallas import tpu as pltpu

# ----------------------------- configuration --------------------------------
N_ATOMS = 14          # ESMFold predicts atom14 coordinates per residue
N_ITER = 4            # synthetic number of structure-module iterations
D_MODEL = 32          # residue embedding dim
D_HIDDEN = 64         # hidden dim of the folding MLP
PAD_ID = 0
LANE = 128            # TPU lane width; output last dim padded to a multiple

# Simple deterministic amino-acid tokenizer (stand-in for AutoTokenizer,
# add_special_tokens=False, padding=True).
_AA = "ACDEFGHIKLMNPQRSTVWY"
_AA2ID = {aa: i + 1 for i, aa in enumerate(_AA)}  # 0 reserved for padding


def tokenize(seqs):
    max_len = max(len(s) for s in seqs)
    ids = []
    for s in seqs:
        row = [_AA2ID.get(c, PAD_ID) for c in s]
        row = row + [PAD_ID] * (max_len - len(s))
        ids.append(row)
    return jnp.asarray(ids, dtype=jnp.int32)  # (B, L)


# ------------------------------ Pallas kernel --------------------------------
def fold_kernel(x_ref, w1_ref, b1_ref, w3_ref, w2p_ref, b2p_ref, pos_ref):
    """All N_ITER structure-module iterations in one kernel invocation.

    x_ref:   (N, D)    initial residue embeddings (N = B*L)
    w1_ref:  (D, H)    trunk weight
    b1_ref:  (1, H)
    w3_ref:  (H, D)    recycling projection
    w2p_ref: (H, A3P)  coordinate head, lane-padded to a multiple of 128
    b2p_ref: (1, A3P)
    pos_ref: (N, A3P)  LAST-iteration atom14 coordinates (lane-padded)
    """
    n = x_ref.shape[0]
    w1 = w1_ref[...]
    w3 = w3_ref[...]
    # Hoist the bias broadcast out of the loop (JAX does not CSE broadcasts).
    b1 = jnp.broadcast_to(b1_ref[...], (n, w1.shape[1]))

    def recycle(_, state):
        h = jnp.maximum(
            jnp.dot(state, w1, preferred_element_type=jnp.float32) + b1, 0.0)
        return state + jnp.dot(h, w3, preferred_element_type=jnp.float32)

    # N_ITER - 1 recycling steps; the coordinate head is only needed for the
    # last iteration (the wrapper only consumes folded_positions[-1]).
    state = lax.fori_loop(0, N_ITER - 1, recycle, x_ref[...], unroll=True)

    # Final iteration: coordinate head only (no further state update needed).
    h = jnp.maximum(
        jnp.dot(state, w1, preferred_element_type=jnp.float32) + b1, 0.0)
    pos_ref[...] = (
        jnp.dot(h, w2p_ref[...], preferred_element_type=jnp.float32)
        + b2p_ref[...])


def run_fold_trunk(x_flat, w1, b1, w2, b2, w3):
    """x_flat: (N, D) f32 -> last-iteration positions (N, N_ATOMS*3) f32."""
    n, _ = x_flat.shape
    hdim = w1.shape[1]
    a3 = w2.shape[1]
    a3p = ((a3 + LANE - 1) // LANE) * LANE

    # Lane-pad the coordinate head with zeros so the kernel's output store is
    # a dense 128-wide write; padded lanes produce exact zeros and are
    # stripped below.
    w2p = jnp.zeros((hdim, a3p), w2.dtype).at[:, :a3].set(w2)
    b2p = jnp.zeros((1, a3p), b2.dtype).at[:, :a3].set(b2)

    vmem_spec = pl.BlockSpec(memory_space=pltpu.MemorySpace.VMEM)
    pos_padded = pl.pallas_call(
        fold_kernel,
        out_shape=jax.ShapeDtypeStruct((n, a3p), jnp.float32),
        in_specs=[vmem_spec] * 6,
        out_specs=vmem_spec,
    )(x_flat, w1, b1, w3, w2p, b2p)

    return pos_padded[:, :a3]


# ----------------------------- EsmFold wrapper -------------------------------
def make_params(key):
    k0, k1, k2, k3, k4 = jax.random.split(key, 5)
    vocab = len(_AA) + 1
    a3 = N_ATOMS * 3
    params = {
        "embed": 0.1 * jax.random.normal(k0, (vocab, D_MODEL), jnp.float32),
        "w1": 0.1 * jax.random.normal(k1, (D_MODEL, D_HIDDEN), jnp.float32),
        "b1": jnp.zeros((1, D_HIDDEN), jnp.float32),
        "w2": 0.1 * jax.random.normal(k2, (D_HIDDEN, a3), jnp.float32),
        "b2": 0.01 * jax.random.normal(k3, (1, a3), jnp.float32),
        "w3": 0.05 * jax.random.normal(k4, (D_HIDDEN, D_MODEL), jnp.float32),
    }
    return params


def esmfold_forward(params, seqs):
    """Mirrors EsmFold.forward(seqs) -> (backbone_coords, final_mask)."""
    token_ids = tokenize(seqs)                       # (B, L)
    B, L = token_ids.shape

    # Embedding lookup (glue, plain JAX gather).
    x = params["embed"][token_ids]                   # (B, L, D)
    x_flat = x.reshape(B * L, D_MODEL)

    # Pallas folding trunk: last-iteration positions, (B*L, N_ATOMS*3).
    pos_flat = run_fold_trunk(x_flat, params["w1"], params["b1"],
                              params["w2"], params["b2"], params["w3"])

    # last iteration positions, ESMFold axis conventions: (B, L, 14, 3)
    last_iteration = pos_flat.reshape(B, L, N_ATOMS, 3)
    backbone_coords = last_iteration[:, :, :4, :]    # (B, L, 4, 3)
    backbone_coords = backbone_coords.reshape(backbone_coords.shape[0], -1, 3)
    Bc, Lc, _ = backbone_coords.shape

    # Reproduce the original mask construction exactly (only row 0 is set,
    # matching the PyTorch module's `final_mask[0, ...]` indexing).
    final_mask = jnp.zeros((Bc, Lc), dtype=jnp.bool_)
    for i in range(len(seqs)):
        final_mask = final_mask.at[0, : len(seqs[i]) * 4].set(True)

    return backbone_coords, final_mask


# ---------------------------------- main --------------------------------------
if __name__ == "__main__":
    key = jax.random.PRNGKey(0)
    params = make_params(key)

    # Two small protein sequences (batch=2, max length L=8).
    seqs = ["MKTAYIAK", "GAVLI"]

    backbone_coords, final_mask = esmfold_forward(params, seqs)
    jax.block_until_ready(backbone_coords)
    jax.block_until_ready(final_mask)

    assert backbone_coords.shape == (2, 8 * 4, 3)
    assert final_mask.shape == (2, 8 * 4)
    assert final_mask.dtype == jnp.bool_

    print("KERNEL_OK")
</pallas_src>

<mosaic_0001>
module attributes {stable_mosaic.version = 11 : i64} {
  func.func @fold_kernel(%arg0: memref<16x32xf32, #tpu.memory_space<vmem>>, %arg1: memref<32x64xf32, #tpu.memory_space<vmem>>, %arg2: memref<1x64xf32, #tpu.memory_space<vmem>>, %arg3: memref<64x32xf32, #tpu.memory_space<vmem>>, %arg4: memref<64x128xf32, #tpu.memory_space<vmem>>, %arg5: memref<1x128xf32, #tpu.memory_space<vmem>>, %arg6: memref<16x128xf32, #tpu.memory_space<vmem>>) attributes {dimension_semantics = [], scalar_prefetch = 0 : i64, scratch_operands = 0 : i64, tpu.core_type = #tpu.core_type<tc>} {
    %c0 = arith.constant 0 : index
    %c0_0 = arith.constant 0 : index
    %0 = vector.load %arg1[%c0, %c0_0] : memref<32x64xf32, #tpu.memory_space<vmem>>, vector<32x64xf32>
    %c0_1 = arith.constant 0 : index
    %c0_2 = arith.constant 0 : index
    %1 = vector.load %arg3[%c0_1, %c0_2] : memref<64x32xf32, #tpu.memory_space<vmem>>, vector<64x32xf32>
    %c0_3 = arith.constant 0 : index
    %c0_4 = arith.constant 0 : index
    %2 = vector.load %arg2[%c0_3, %c0_4] : memref<1x64xf32, #tpu.memory_space<vmem>>, vector<1x64xf32>
    %3 = vector.shape_cast %2 : vector<1x64xf32> to vector<1x64xf32>
    %4 = vector.broadcast %3 : vector<1x64xf32> to vector<16x64xf32>
    %c0_5 = arith.constant 0 : index
    %c0_6 = arith.constant 0 : index
    %5 = vector.load %arg0[%c0_5, %c0_6] : memref<16x32xf32, #tpu.memory_space<vmem>>, vector<16x32xf32>
    %c0_i32 = arith.constant 0 : i32
    %cst = arith.constant dense<0.000000e+00> : vector<16x64xf32>
    %6 = tpu.matmul %5, %0, %cst {dimension_numbers = #tpu.dot_dimension_numbers<[1], [0], [0], [1], [0, 0, 1, 1], [], []>} : vector<16x32xf32>, vector<32x64xf32>, vector<16x64xf32> -> vector<16x64xf32>
    %7 = arith.addf %6, %4 : vector<16x64xf32>
    %cst_7 = arith.constant 0.000000e+00 : f32
    %8 = vector.broadcast %cst_7 : f32 to vector<16x64xf32>
    %9 = arith.maximumf %7, %8 : vector<16x64xf32>
    %cst_8 = arith.constant dense<0.000000e+00> : vector<16x32xf32>
    %10 = tpu.matmul %9, %1, %cst_8 {dimension_numbers = #tpu.dot_dimension_numbers<[1], [0], [0], [1], [0, 0, 1, 1], [], []>} : vector<16x64xf32>, vector<64x32xf32>, vector<16x32xf32> -> vector<16x32xf32>
    %11 = arith.addf %5, %10 : vector<16x32xf32>
    %c1_i32 = arith.constant 1 : i32
    %cst_9 = arith.constant dense<0.000000e+00> : vector<16x64xf32>
    %12 = tpu.matmul %11, %0, %cst_9 {dimension_numbers = #tpu.dot_dimension_numbers<[1], [0], [0], [1], [0, 0, 1, 1], [], []>} : vector<16x32xf32>, vector<32x64xf32>, vector<16x64xf32> -> vector<16x64xf32>
    %13 = arith.addf %12, %4 : vector<16x64xf32>
    %cst_10 = arith.constant 0.000000e+00 : f32
    %14 = vector.broadcast %cst_10 : f32 to vector<16x64xf32>
    %15 = arith.maximumf %13, %14 : vector<16x64xf32>
    %cst_11 = arith.constant dense<0.000000e+00> : vector<16x32xf32>
    %16 = tpu.matmul %15, %1, %cst_11 {dimension_numbers = #tpu.dot_dimension_numbers<[1], [0], [0], [1], [0, 0, 1, 1], [], []>} : vector<16x64xf32>, vector<64x32xf32>, vector<16x32xf32> -> vector<16x32xf32>
    %17 = arith.addf %11, %16 : vector<16x32xf32>
    %c2_i32 = arith.constant 2 : i32
    %cst_12 = arith.constant dense<0.000000e+00> : vector<16x64xf32>
    %18 = tpu.matmul %17, %0, %cst_12 {dimension_numbers = #tpu.dot_dimension_numbers<[1], [0], [0], [1], [0, 0, 1, 1], [], []>} : vector<16x32xf32>, vector<32x64xf32>, vector<16x64xf32> -> vector<16x64xf32>
    %19 = arith.addf %18, %4 : vector<16x64xf32>
    %cst_13 = arith.constant 0.000000e+00 : f32
    %20 = vector.broadcast %cst_13 : f32 to vector<16x64xf32>
    %21 = arith.maximumf %19, %20 : vector<16x64xf32>
    %cst_14 = arith.constant dense<0.000000e+00> : vector<16x32xf32>
    %22 = tpu.matmul %21, %1, %cst_14 {dimension_numbers = #tpu.dot_dimension_numbers<[1], [0], [0], [1], [0, 0, 1, 1], [], []>} : vector<16x64xf32>, vector<64x32xf32>, vector<16x32xf32> -> vector<16x32xf32>
    %23 = arith.addf %17, %22 : vector<16x32xf32>
    %cst_15 = arith.constant dense<0.000000e+00> : vector<16x64xf32>
    %24 = tpu.matmul %23, %0, %cst_15 {dimension_numbers = #tpu.dot_dimension_numbers<[1], [0], [0], [1], [0, 0, 1, 1], [], []>} : vector<16x32xf32>, vector<32x64xf32>, vector<16x64xf32> -> vector<16x64xf32>
    %25 = arith.addf %24, %4 : vector<16x64xf32>
    %cst_16 = arith.constant 0.000000e+00 : f32
    %26 = vector.broadcast %cst_16 : f32 to vector<16x64xf32>
    %27 = arith.maximumf %25, %26 : vector<16x64xf32>
    %c0_17 = arith.constant 0 : index
    %c0_18 = arith.constant 0 : index
    %28 = vector.load %arg4[%c0_17, %c0_18] : memref<64x128xf32, #tpu.memory_space<vmem>>, vector<64x128xf32>
    %cst_19 = arith.constant dense<0.000000e+00> : vector<16x128xf32>
    %29 = tpu.matmul %27, %28, %cst_19 {dimension_numbers = #tpu.dot_dimension_numbers<[1], [0], [0], [1], [0, 0, 1, 1], [], []>} : vector<16x64xf32>, vector<64x128xf32>, vector<16x128xf32> -> vector<16x128xf32>
    %c0_20 = arith.constant 0 : index
    %c0_21 = arith.constant 0 : index
    %30 = vector.load %arg5[%c0_20, %c0_21] : memref<1x128xf32, #tpu.memory_space<vmem>>, vector<1x128xf32>
    %31 = vector.broadcast %30 : vector<1x128xf32> to vector<16x128xf32>
    %32 = arith.addf %29, %31 : vector<16x128xf32>
    %c0_22 = arith.constant 0 : index
    %c0_23 = arith.constant 0 : index
    %33 = vector.load %arg6[%c0_22, %c0_23] : memref<16x128xf32, #tpu.memory_space<vmem>>, vector<16x128xf32>
    tpu.vector_store %arg6[%c0_22, %c0_23], %32 {strides = array<i32>} : memref<16x128xf32, #tpu.memory_space<vmem>>, vector<16x128xf32>,
    return
  }
}

</mosaic_0001>

<llo_original>
// kernel: tpu_custom_call.1
$region0: #{tpu_custom_call.1}
  #allocation0 [shape = 'u32[]', space=smem, size = 0x4, offset = 0x4, fixed_abs, tag = 'smem constant byte address 0x4 - core index']
  #allocation1 [shape = 'u32[144,128]{1,0:T(1,128)}', space=vmem, size = 0x12000, scoped, tag = 'internal scratch']
  %s0 = inlined_call_operand.hbm [shape: f32[16,32], index: 0, kind: input, shape index: {}]
  %s1 = inlined_call_operand.vmem [shape: f32[32,64], index: 1, kind: input, shape index: {}]
  %s2 = inlined_call_operand.vmem [shape: f32[1,64], index: 2, kind: input, shape index: {}]
  %s3 = inlined_call_operand.vmem [shape: f32[64,32], index: 3, kind: input, shape index: {}]
  %s4 = inlined_call_operand.vmem [shape: f32[64,128], index: 4, kind: input, shape index: {}]
  %s5 = inlined_call_operand.vmem [shape: f32[1,128], index: 5, kind: input, shape index: {}]
  %s6 = inlined_call_operand.hbm [shape: f32[16,128], index: 6, kind: output, shape index: {}]
  %s7 = sld [smem:[#allocation0]]
  $region38: #{tpu_custom_call.1} parent=0
    _
  %s9 = ssub.s32 1, %s7
  %s10 = scalar_select 0, %s9, %s7
  $region1: #{tpu_custom_call.1} parent=0
    #allocation2 [shape = 'u8[8192]{0}', space=vmem, size = 0x2000, scoped, tag = 'input window, operand 0, single buffered']
    #allocation3 [shape = 's32[1]{0}', space=sflag, size = 0x4, scoped, tag = 'scoped memory for tpu_custom_call.1']
    #allocation4 [shape = 's32[1]{0}', space=sflag, size = 0x4, scoped, tag = 'scoped memory for tpu_custom_call.1']
    #allocation5 [shape = 'u8[8192]{0}', space=vmem, size = 0x2000, scoped, tag = 'output window, operand 0, single buffered']
    %11 = vsyncpa [#allocation3], 0
    %12 = vsyncpa [#allocation4], 0
    // Predicated region
    $region2: #{tpu_custom_call.1} parent=1 // pred_check
      _
    $region3: #{tpu_custom_call.1} parent=1 // pred_check_branch
      %14 = sbr.rel (0) target = $region5
    $region4: #{tpu_custom_call.1} parent=1 // pred_region
      %s16 = ssub.s32 256, 256
      %17 = vsyncadd [#allocation3], %s16
      %s18 = sshll.u32 [#allocation2], 4
      %s19 = int_to_ptr.vmem [resolvable:$true] %s18
      %24 = dma.hbm_to_vmem [thread:$0]  %s0, 256, %s19, [#allocation3], 128, 128, 8
    $region5: #{tpu_custom_call.1} parent=1 // pred_fallthru
      _
    // Predicated region
    $region6: #{tpu_custom_call.1} parent=1 // pred_check
      _
    $region7: #{tpu_custom_call.1} parent=1 // pred_check_branch
      %26 = sbr.rel (0) target = $region9
    $region8: #{tpu_custom_call.1} parent=1 // pred_region
      _
    $region9: #{tpu_custom_call.1} parent=1 // pred_fallthru
      _
    // Predicated region
    $region10: #{tpu_custom_call.1} parent=1 // pred_check
      _
    $region11: #{tpu_custom_call.1} parent=1 // pred_check_branch
      %28 = sbr.rel (0) target = $region13
    $region12: #{tpu_custom_call.1} parent=1 // pred_region
      _
    $region13: #{tpu_custom_call.1} parent=1 // pred_fallthru
      _
    // Predicated region
    $region14: #{tpu_custom_call.1} parent=1 // pred_check
      _
    $region15: #{tpu_custom_call.1} parent=1 // pred_check_branch
      %30 = sbr.rel (0) target = $region17
    $region16: #{tpu_custom_call.1} parent=1 // pred_region
      _
    $region17: #{tpu_custom_call.1} parent=1 // pred_fallthru
      _
    // Predicated region
    $region18: #{tpu_custom_call.1} parent=1 // pred_check
      _
    $region19: #{tpu_custom_call.1} parent=1 // pred_check_branch
      %32 = sbr.rel (0) target = $region21
    $region20: #{tpu_custom_call.1} parent=1 // pred_region
      _
    $region21: #{tpu_custom_call.1} parent=1 // pred_fallthru
      _
    // Predicated region
    $region22: #{tpu_custom_call.1} parent=1 // pred_check
      _
    $region23: #{tpu_custom_call.1} parent=1 // pred_check_branch
      %34 = sbr.rel (0) target = $region25
    $region24: #{tpu_custom_call.1} parent=1 // pred_region
      _
    $region25: #{tpu_custom_call.1} parent=1 // pred_fallthru
      _
    // Predicated region
    $region26: #{tpu_custom_call.1} parent=1 // pred_check
      _
    $region27: #{tpu_custom_call.1} parent=1 // pred_check_branch
      %36 = sbr.rel (0) target = $region29
    $region28: #{tpu_custom_call.1} parent=1 // pred_region
      %37 = dma.done [#allocation3], 256
    $region29: #{tpu_custom_call.1} parent=1 // pred_fallthru
      _
    %v38 = vld [vmem:[%s1] sm:$0xff]
    %v39 = vld [vmem:[%s1 + $0x8] sm:$0xff]
    %v40 = vld [vmem:[%s1 + $0x10] sm:$0xff]
    %v41 = vld [vmem:[%s1 + $0x18] sm:$0xff]
    %v42 = vld [vmem:[%s3] sm:$0xff]
    %v43 = vld [vmem:[%s3 + $0x8] sm:$0xff]
    %v44 = vld [vmem:[%s3 + $0x10] sm:$0xff]
    %v45 = vld [vmem:[%s3 + $0x18] sm:$0xff]
    %v46 = vld [vmem:[%s3 + $0x20] sm:$0xff]
    %v47 = vld [vmem:[%s3 + $0x28] sm:$0xff]
    %v48 = vld [vmem:[%s3 + $0x30] sm:$0xff]
    %v49 = vld [vmem:[%s3 + $0x38] sm:$0xff]
    %v50 = vld [vmem:[%s2] sm:$0x1]
    %v52 = vlaneseq
    %v53 = vshrl.u32 %v52, 7
    %v54 = vsub.s32 0, %v53
    %v55 = vrot.slane %v50, %v54
    %v57 = vld [vmem:[#allocation2] sm:$0xff]
    %v58 = vld [vmem:[#allocation2 + $0x8] sm:$0xff]
    %vm59 = vcmask 261120
    %v61 = vsel %vm59, %v57, 0
    %v64 = vsel %vm59, %v58, 0
    %66 = vmatprep.subr.mxu0 0.0
    %67 = vmatpush1.msra.mxu0 %v38
    %68 = vmatprep.subr.mxu0 0.0
    %69 = vmatpush1.msra.mxu0 %v39
    %70 = vmatprep.subr.mxu0 0.0
    %71 = vmatpush1.msra.mxu0 %v40
    %72 = vmatprep.subr.mxu0 0.0
    %73 = vmatpush1.msra.mxu0 %v41
    %74 = vmatprep.subr.mxu0 0.0
    %75 = vmatpush1.msra.mxu0 0.0
    %76 = vmatprep.subr.mxu0 0.0
    %77 = vmatpush1.msra.mxu0 0.0
    %78 = vmatprep.subr.mxu0 0.0
    %79 = vmatpush1.msra.mxu0 0.0
    %80 = vmatprep.subr.mxu0 0.0
    %81 = vmatpush1.msra.mxu0 0.0
    %82 = vmatprep.subr.mxu0 0.0
    %83 = vmatpush1.msra.mxu0 0.0
    %84 = vmatprep.subr.mxu0 0.0
    %85 = vmatpush1.msra.mxu0 0.0
    %86 = vmatprep.subr.mxu0 0.0
    %87 = vmatpush1.msra.mxu0 0.0
    %88 = vmatprep.subr.mxu0 0.0
    %89 = vmatpush1.msra.mxu0 0.0
    %90 = vmatprep.subr.mxu0 0.0
    %91 = vmatpush1.msra.mxu0 0.0
    %92 = vmatprep.subr.mxu0 0.0
    %93 = vmatpush1.msra.mxu0 0.0
    %94 = vmatprep.subr.mxu0 0.0
    %95 = vmatpush1.msra.mxu0 0.0
    %96 = vmatprep.subr.mxu0 0.0
    %97 = vmatpush1.msra.mxu0 0.0
    %98 = vmatprep.subr.mxu0 0.0
    %99 = vmatpush1.msra.mxu0 0.0
    %100 = vmatprep.subr.mxu0 0.0
    %101 = vmatpush1.msra.mxu0 0.0
    %102 = vmatprep.subr.mxu0 0.0
    %103 = vmatpush1.msra.mxu0 0.0
    %104 = vmatprep.subr.mxu0 0.0
    %105 = vmatpush1.msra.mxu0 0.0
    %106 = vmatprep.subr.mxu0 0.0
    %107 = vmatpush1.msra.mxu0 0.0
    %108 = vmatprep.subr.mxu0 0.0
    %109 = vmatpush1.msra.mxu0 0.0
    %110 = vmatprep.subr.mxu0 0.0
    %111 = vmatpush1.msra.mxu0 0.0
    %112 = vmatprep.subr.mxu0 0.0
    %113 = vmatpush1.msra.mxu0 0.0
    %114 = vmatprep.subr.mxu0 0.0
    %115 = vmatpush1.msra.mxu0 0.0
    %116 = vmatprep.subr.mxu0 0.0
    %117 = vmatpush1.msra.mxu0 0.0
    %118 = vmatprep.subr.mxu0 0.0
    %119 = vmatpush1.msra.mxu0 0.0
    %120 = vmatprep.subr.mxu0 0.0
    %121 = vmatpush1.msra.mxu0 0.0
    %122 = vmatprep.subr.mxu0 0.0
    %123 = vmatpush1.msra.mxu0 0.0
    %124 = vmatprep.subr.mxu0 0.0
    %125 = vmatpush1.msra.mxu0 0.0
    %126 = vmatprep.subr.mxu0 0.0
    %127 = vmatpush1.msra.mxu0 0.0
    %128 = vmatprep.subr.mxu0 0.0
    %129 = vmatpush1.msra.mxu0 0.0
    %130 = vmatprep.mubr.f32.mxu0 0.0
    %131 = vmatmul.mubr.f32.gmra.mrb[0].mxu0 %v61
    %v132 = vpop.f32.mrb[0].mxu0
    %v133 = vadd.f32 %v55, %v132
    %v134 = vpop.f32.mrb[0].mxu0
    %135 = vmatprep.mubr.f32.mxu0 0.0
    %136 = vmatmul.mubr.f32.gmra.mrb[0].mxu0 %v64
    %v137 = vpop.f32.mrb[0].mxu0
    %v138 = vadd.f32 %v55, %v137
    %v139 = vpop.f32.mrb[0].mxu0
    %140 = vdwg.mxu0
    %v141 = vmax.f32 %v133, 0.0
    %v142 = vmax.f32 %v138, 0.0
    %vm143 = vcmask 523264
    %v145 = vsel %vm143, %v141, 0
    %v148 = vsel %vm143, %v142, 0
    %150 = vmatprep.subr.mxu0 0.0
    %151 = vmatpush1.msra.mxu0 %v42
    %152 = vmatprep.subr.mxu0 0.0
    %153 = vmatpush1.msra.mxu0 %v43
    %154 = vmatprep.subr.mxu0 0.0
    %155 = vmatpush1.msra.mxu0 %v44
    %156 = vmatprep.subr.mxu0 0.0
    %157 = vmatpush1.msra.mxu0 %v45
    %158 = vmatprep.subr.mxu0 0.0
    %159 = vmatpush1.msra.mxu0 %v46
    %160 = vmatprep.subr.mxu0 0.0
    %161 = vmatpush1.msra.mxu0 %v47
    %162 = vmatprep.subr.mxu0 0.0
    %163 = vmatpush1.msra.mxu0 %v48
    %164 = vmatprep.subr.mxu0 0.0
    %165 = vmatpush1.msra.mxu0 %v49
    %166 = vmatprep.subr.mxu0 0.0
    %167 = vmatpush1.msra.mxu0 0.0
    %168 = vmatprep.subr.mxu0 0.0
    %169 = vmatpush1.msra.mxu0 0.0
    %170 = vmatprep.subr.mxu0 0.0
    %171 = vmatpush1.msra.mxu0 0.0
    %172 = vmatprep.subr.mxu0 0.0
    %173 = vmatpush1.msra.mxu0 0.0
    %174 = vmatprep.subr.mxu0 0.0
    %175 = vmatpush1.msra.mxu0 0.0
    %176 = vmatprep.subr.mxu0 0.0
    %177 = vmatpush1.msra.mxu0 0.0
    %178 = vmatprep.subr.mxu0 0.0
    %179 = vmatpush1.msra.mxu0 0.0
    %180 = vmatprep.subr.mxu0 0.0
    %181 = vmatpush1.msra.mxu0 0.0
    %182 = vmatprep.subr.mxu0 0.0
    %183 = vmatpush1.msra.mxu0 0.0
    %184 = vmatprep.subr.mxu0 0.0
    %185 = vmatpush1.msra.mxu0 0.0
    %186 = vmatprep.subr.mxu0 0.0
    %187 = vmatpush1.msra.mxu0 0.0
    %188 = vmatprep.subr.mxu0 0.0
    %189 = vmatpush1.msra.mxu0 0.0
    %190 = vmatprep.subr.mxu0 0.0
    %191 = vmatpush1.msra.mxu0 0.0
    %192 = vmatprep.subr.mxu0 0.0
    %193 = vmatpush1.msra.mxu0 0.0
    %194 = vmatprep.subr.mxu0 0.0
    %195 = vmatpush1.msra.mxu0 0.0
    %196 = vmatprep.subr.mxu0 0.0
    %197 = vmatpush1.msra.mxu0 0.0
    %198 = vmatprep.subr.mxu0 0.0
    %199 = vmatpush1.msra.mxu0 0.0
    %200 = vmatprep.subr.mxu0 0.0
    %201 = vmatpush1.msra.mxu0 0.0
    %202 = vmatprep.subr.mxu0 0.0
    %203 = vmatpush1.msra.mxu0 0.0
    %204 = vmatprep.subr.mxu0 0.0
    %205 = vmatpush1.msra.mxu0 0.0
    %206 = vmatprep.subr.mxu0 0.0
    %207 = vmatpush1.msra.mxu0 0.0
    %208 = vmatprep.subr.mxu0 0.0
    %209 = vmatpush1.msra.mxu0 0.0
    %210 = vmatprep.subr.mxu0 0.0
    %211 = vmatpush1.msra.mxu0 0.0
    %212 = vmatprep.subr.mxu0 0.0
    %213 = vmatpush1.msra.mxu0 0.0
    %214 = vmatprep.mubr.f32.mxu0 0.0
    %215 = vmatmul.mubr.f32.gmra.mrb[0].mxu0 %v145
    %v216 = vpop.f32.mrb[0].mxu0
    %v217 = vadd.f32 0.0, %v216
    %v218 = vpop.f32.mrb[0].mxu0
    %219 = vmatprep.mubr.f32.mxu0 0.0
    %220 = vmatmul.mubr.f32.gmra.mrb[0].mxu0 %v148
    %v221 = vpop.f32.mrb[0].mxu0
    %v222 = vadd.f32 0.0, %v221
    %v223 = vpop.f32.mrb[0].mxu0
    %224 = vdwg.mxu0
    %v225 = vadd.f32 %v57, %v217
    %v226 = vadd.f32 %v58, %v222
    %v228 = vsel %vm59, %v225, 0
    %v231 = vsel %vm59, %v226, 0
    %233 = vmatprep.subr.mxu0 0.0
    %234 = vmatpush1.msra.mxu0 %v38
    %235 = vmatprep.subr.mxu0 0.0
    %236 = vmatpush1.msra.mxu0 %v39
    %237 = vmatprep.subr.mxu0 0.0
    %238 = vmatpush1.msra.mxu0 %v40
    %239 = vmatprep.subr.mxu0 0.0
    %240 = vmatpush1.msra.mxu0 %v41
    %241 = vmatprep.subr.mxu0 0.0
    %242 = vmatpush1.msra.mxu0 0.0
    %243 = vmatprep.subr.mxu0 0.0
    %244 = vmatpush1.msra.mxu0 0.0
    %245 = vmatprep.subr.mxu0 0.0
    %246 = vmatpush1.msra.mxu0 0.0
    %247 = vmatprep.subr.mxu0 0.0
    %248 = vmatpush1.msra.mxu0 0.0
    %249 = vmatprep.subr.mxu0 0.0
    %250 = vmatpush1.msra.mxu0 0.0
    %251 = vmatprep.subr.mxu0 0.0
    %252 = vmatpush1.msra.mxu0 0.0
    %253 = vmatprep.subr.mxu0 0.0
    %254 = vmatpush1.msra.mxu0 0.0
    %255 = vmatprep.subr.mxu0 0.0
    %256 = vmatpush1.msra.mxu0 0.0
    %257 = vmatprep.subr.mxu0 0.0
    %258 = vmatpush1.msra.mxu0 0.0
    %259 = vmatprep.subr.mxu0 0.0
    %260 = vmatpush1.msra.mxu0 0.0
    %261 = vmatprep.subr.mxu0 0.0
    %262 = vmatpush1.msra.mxu0 0.0
    %263 = vmatprep.subr.mxu0 0.0
    %264 = vmatpush1.msra.mxu0 0.0
    %265 = vmatprep.subr.mxu0 0.0
    %266 = vmatpush1.msra.mxu0 0.0
    %267 = vmatprep.subr.mxu0 0.0
    %268 = vmatpush1.msra.mxu0 0.0
    %269 = vmatprep.subr.mxu0 0.0
    %270 = vmatpush1.msra.mxu0 0.0
    %271 = vmatprep.subr.mxu0 0.0
    %272 = vmatpush1.msra.mxu0 0.0
    %273 = vmatprep.subr.mxu0 0.0
    %274 = vmatpush1.msra.mxu0 0.0
    %275 = vmatprep.subr.mxu0 0.0
    %276 = vmatpush1.msra.mxu0 0.0
    %277 = vmatprep.subr.mxu0 0.0
    %278 = vmatpush1.msra.mxu0 0.0
    %279 = vmatprep.subr.mxu0 0.0
    %280 = vmatpush1.msra.mxu0 0.0
    %281 = vmatprep.subr.mxu0 0.0
    %282 = vmatpush1.msra.mxu0 0.0
    %283 = vmatprep.subr.mxu0 0.0
    %284 = vmatpush1.msra.mxu0 0.0
    %285 = vmatprep.subr.mxu0 0.0
    %286 = vmatpush1.msra.mxu0 0.0
    %287 = vmatprep.subr.mxu0 0.0
    %288 = vmatpush1.msra.mxu0 0.0
    %289 = vmatprep.subr.mxu0 0.0
    %290 = vmatpush1.msra.mxu0 0.0
    %291 = vmatprep.subr.mxu0 0.0
    %292 = vmatpush1.msra.mxu0 0.0
    %293 = vmatprep.subr.mxu0 0.0
    %294 = vmatpush1.msra.mxu0 0.0
    %295 = vmatprep.subr.mxu0 0.0
    %296 = vmatpush1.msra.mxu0 0.0
    %297 = vmatprep.mubr.f32.mxu0 0.0
    %298 = vmatmul.mubr.f32.gmra.mrb[0].mxu0 %v228
    %v299 = vpop.f32.mrb[0].mxu0
    %v300 = vadd.f32 %v55, %v299
    %v301 = vpop.f32.mrb[0].mxu0
    %302 = vmatprep.mubr.f32.mxu0 0.0
    %303 = vmatmul.mubr.f32.gmra.mrb[0].mxu0 %v231
    %v304 = vpop.f32.mrb[0].mxu0
    %v305 = vadd.f32 %v55, %v304
    %v306 = vpop.f32.mrb[0].mxu0
    %307 = vdwg.mxu0
    %v308 = vmax.f32 %v300, 0.0
    %v309 = vmax.f32 %v305, 0.0
    %v311 = vsel %vm143, %v308, 0
    %v314 = vsel %vm143, %v309, 0
    %316 = vmatprep.subr.mxu0 0.0
    %317 = vmatpush1.msra.mxu0 %v42
    %318 = vmatprep.subr.mxu0 0.0
    %319 = vmatpush1.msra.mxu0 %v43
    %320 = vmatprep.subr.mxu0 0.0
    %321 = vmatpush1.msra.mxu0 %v44
    %322 = vmatprep.subr.mxu0 0.0
    %323 = vmatpush1.msra.mxu0 %v45
    %324 = vmatprep.subr.mxu0 0.0
    %325 = vmatpush1.msra.mxu0 %v46
    %326 = vmatprep.subr.mxu0 0.0
    %327 = vmatpush1.msra.mxu0 %v47
    %328 = vmatprep.subr.mxu0 0.0
    %329 = vmatpush1.msra.mxu0 %v48
    %330 = vmatprep.subr.mxu0 0.0
    %331 = vmatpush1.msra.mxu0 %v49
    %332 = vmatprep.subr.mxu0 0.0
    %333 = vmatpush1.msra.mxu0 0.0
    %334 = vmatprep.subr.mxu0 0.0
    %335 = vmatpush1.msra.mxu0 0.0
    %336 = vmatprep.subr.mxu0 0.0
    %337 = vmatpush1.msra.mxu0 0.0
    %338 = vmatprep.subr.mxu0 0.0
    %339 = vmatpush1.msra.mxu0 0.0
    %340 = vmatprep.subr.mxu0 0.0
    %341 = vmatpush1.msra.mxu0 0.0
    %342 = vmatprep.subr.mxu0 0.0
    %343 = vmatpush1.msra.mxu0 0.0
    %344 = vmatprep.subr.mxu0 0.0
    %345 = vmatpush1.msra.mxu0 0.0
    %346 = vmatprep.subr.mxu0 0.0
    %347 = vmatpush1.msra.mxu0 0.0
    %348 = vmatprep.subr.mxu0 0.0
    %349 = vmatpush1.msra.mxu0 0.0
    %350 = vmatprep.subr.mxu0 0.0
    %351 = vmatpush1.msra.mxu0 0.0
    %352 = vmatprep.subr.mxu0 0.0
    %353 = vmatpush1.msra.mxu0 0.0
    %354 = vmatprep.subr.mxu0 0.0
    %355 = vmatpush1.msra.mxu0 0.0
    %356 = vmatprep.subr.mxu0 0.0
    %357 = vmatpush1.msra.mxu0 0.0
    %358 = vmatprep.subr.mxu0 0.0
    %359 = vmatpush1.msra.mxu0 0.0
    %360 = vmatprep.subr.mxu0 0.0
    %361 = vmatpush1.msra.mxu0 0.0
    %362 = vmatprep.subr.mxu0 0.0
    %363 = vmatpush1.msra.mxu0 0.0
    %364 = vmatprep.subr.mxu0 0.0
    %365 = vmatpush1.msra.mxu0 0.0
    %366 = vmatprep.subr.mxu0 0.0
    %367 = vmatpush1.msra.mxu0 0.0
    %368 = vmatprep.subr.mxu0 0.0
    %369 = vmatpush1.msra.mxu0 0.0
    %370 = vmatprep.subr.mxu0 0.0
    %371 = vmatpush1.msra.mxu0 0.0
    %372 = vmatprep.subr.mxu0 0.0
    %373 = vmatpush1.msra.mxu0 0.0
    %374 = vmatprep.subr.mxu0 0.0
    %375 = vmatpush1.msra.mxu0 0.0
    %376 = vmatprep.subr.mxu0 0.0
    %377 = vmatpush1.msra.mxu0 0.0
    %378 = vmatprep.subr.mxu0 0.0
    %379 = vmatpush1.msra.mxu0 0.0
    %380 = vmatprep.mubr.f32.mxu0 0.0
    %381 = vmatmul.mubr.f32.gmra.mrb[0].mxu0 %v311
    %v382 = vpop.f32.mrb[0].mxu0
    %v383 = vadd.f32 0.0, %v382
    %v384 = vpop.f32.mrb[0].mxu0
    %385 = vmatprep.mubr.f32.mxu0 0.0
    %386 = vmatmul.mubr.f32.gmra.mrb[0].mxu0 %v314
    %v387 = vpop.f32.mrb[0].mxu0
    %v388 = vadd.f32 0.0, %v387
    %v389 = vpop.f32.mrb[0].mxu0
    %390 = vdwg.mxu0
    %v391 = vadd.f32 %v225, %v383
    %v392 = vadd.f32 %v226, %v388
    %v394 = vsel %vm59, %v391, 0
    %v397 = vsel %vm59, %v392, 0
    %399 = vmatprep.subr.mxu0 0.0
    %400 = vmatpush1.msra.mxu0 %v38
    %401 = vmatprep.subr.mxu0 0.0
    %402 = vmatpush1.msra.mxu0 %v39
    %403 = vmatprep.subr.mxu0 0.0
    %404 = vmatpush1.msra.mxu0 %v40
    %405 = vmatprep.subr.mxu0 0.0
    %406 = vmatpush1.msra.mxu0 %v41
    %407 = vmatprep.subr.mxu0 0.0
    %408 = vmatpush1.msra.mxu0 0.0
    %409 = vmatprep.subr.mxu0 0.0
    %410 = vmatpush1.msra.mxu0 0.0
    %411 = vmatprep.subr.mxu0 0.0
    %412 = vmatpush1.msra.mxu0 0.0
    %413 = vmatprep.subr.mxu0 0.0
    %414 = vmatpush1.msra.mxu0 0.0
    %415 = vmatprep.subr.mxu0 0.0
    %416 = vmatpush1.msra.mxu0 0.0
    %417 = vmatprep.subr.mxu0 0.0
    %418 = vmatpush1.msra.mxu0 0.0
    %419 = vmatprep.subr.mxu0 0.0
    %420 = vmatpush1.msra.mxu0 0.0
    %421 = vmatprep.subr.mxu0 0.0
    %422 = vmatpush1.msra.mxu0 0.0
    %423 = vmatprep.subr.mxu0 0.0
    %424 = vmatpush1.msra.mxu0 0.0
    %425 = vmatprep.subr.mxu0 0.0
    %426 = vmatpush1.msra.mxu0 0.0
    %427 = vmatprep.subr.mxu0 0.0
    %428 = vmatpush1.msra.mxu0 0.0
    %429 = vmatprep.subr.mxu0 0.0
    %430 = vmatpush1.msra.mxu0 0.0
    %431 = vmatprep.subr.mxu0 0.0
    %432 = vmatpush1.msra.mxu0 0.0
    %433 = vmatprep.subr.mxu0 0.0
    %434 = vmatpush1.msra.mxu0 0.0
    %435 = vmatprep.subr.mxu0 0.0
    %436 = vmatpush1.msra.mxu0 0.0
    %437 = vmatprep.subr.mxu0 0.0
    %438 = vmatpush1.msra.mxu0 0.0
    %439 = vmatprep.subr.mxu0 0.0
    %440 = vmatpush1.msra.mxu0 0.0
    %441 = vmatprep.subr.mxu0 0.0
    %442 = vmatpush1.msra.mxu0 0.0
    %443 = vmatprep.subr.mxu0 0.0
    %444 = vmatpush1.msra.mxu0 0.0
    %445 = vmatprep.subr.mxu0 0.0
    %446 = vmatpush1.msra.mxu0 0.0
    %447 = vmatprep.subr.mxu0 0.0
    %448 = vmatpush1.msra.mxu0 0.0
    %449 = vmatprep.subr.mxu0 0.0
    %450 = vmatpush1.msra.mxu0 0.0
    %451 = vmatprep.subr.mxu0 0.0
    %452 = vmatpush1.msra.mxu0 0.0
    %453 = vmatprep.subr.mxu0 0.0
    %454 = vmatpush1.msra.mxu0 0.0
    %455 = vmatprep.subr.mxu0 0.0
    %456 = vmatpush1.msra.mxu0 0.0
    %457 = vmatprep.subr.mxu0 0.0
    %458 = vmatpush1.msra.mxu0 0.0
    %459 = vmatprep.subr.mxu0 0.0
    %460 = vmatpush1.msra.mxu0 0.0
    %461 = vmatprep.subr.mxu0 0.0
    %462 = vmatpush1.msra.mxu0 0.0
    %463 = vmatprep.mubr.f32.mxu0 0.0
    %464 = vmatmul.mubr.f32.gmra.mrb[0].mxu0 %v394
    %v465 = vpop.f32.mrb[0].mxu0
    %v466 = vadd.f32 %v55, %v465
    %v467 = vpop.f32.mrb[0].mxu0
    %468 = vmatprep.mubr.f32.mxu0 0.0
    %469 = vmatmul.mubr.f32.gmra.mrb[0].mxu0 %v397
    %v470 = vpop.f32.mrb[0].mxu0
    %v471 = vadd.f32 %v55, %v470
    %v472 = vpop.f32.mrb[0].mxu0
    %473 = vdwg.mxu0
    %v474 = vmax.f32 %v466, 0.0
    %v475 = vmax.f32 %v471, 0.0
    %v477 = vsel %vm143, %v474, 0
    %v480 = vsel %vm143, %v475, 0
    %482 = vmatprep.subr.mxu0 0.0
    %483 = vmatpush1.msra.mxu0 %v42
    %484 = vmatprep.subr.mxu0 0.0
    %485 = vmatpush1.msra.mxu0 %v43
    %486 = vmatprep.subr.mxu0 0.0
    %487 = vmatpush1.msra.mxu0 %v44
    %488 = vmatprep.subr.mxu0 0.0
    %489 = vmatpush1.msra.mxu0 %v45
    %490 = vmatprep.subr.mxu0 0.0
    %491 = vmatpush1.msra.mxu0 %v46
    %492 = vmatprep.subr.mxu0 0.0
    %493 = vmatpush1.msra.mxu0 %v47
    %494 = vmatprep.subr.mxu0 0.0
    %495 = vmatpush1.msra.mxu0 %v48
    %496 = vmatprep.subr.mxu0 0.0
    %497 = vmatpush1.msra.mxu0 %v49
    %498 = vmatprep.subr.mxu0 0.0
    %499 = vmatpush1.msra.mxu0 0.0
    %500 = vmatprep.subr.mxu0 0.0
    %501 = vmatpush1.msra.mxu0 0.0
    %502 = vmatprep.subr.mxu0 0.0
    %503 = vmatpush1.msra.mxu0 0.0
    %504 = vmatprep.subr.mxu0 0.0
    %505 = vmatpush1.msra.mxu0 0.0
    %506 = vmatprep.subr.mxu0 0.0
    %507 = vmatpush1.msra.mxu0 0.0
    %508 = vmatprep.subr.mxu0 0.0
    %509 = vmatpush1.msra.mxu0 0.0
    %510 = vmatprep.subr.mxu0 0.0
    %511 = vmatpush1.msra.mxu0 0.0
    %512 = vmatprep.subr.mxu0 0.0
    %513 = vmatpush1.msra.mxu0 0.0
    %514 = vmatprep.subr.mxu0 0.0
    %515 = vmatpush1.msra.mxu0 0.0
    %516 = vmatprep.subr.mxu0 0.0
    %517 = vmatpush1.msra.mxu0 0.0
    %518 = vmatprep.subr.mxu0 0.0
    %519 = vmatpush1.msra.mxu0 0.0
    %520 = vmatprep.subr.mxu0 0.0
    %521 = vmatpush1.msra.mxu0 0.0
    %522 = vmatprep.subr.mxu0 0.0
    %523 = vmatpush1.msra.mxu0 0.0
    %524 = vmatprep.subr.mxu0 0.0
    %525 = vmatpush1.msra.mxu0 0.0
    %526 = vmatprep.subr.mxu0 0.0
    %527 = vmatpush1.msra.mxu0 0.0
    %528 = vmatprep.subr.mxu0 0.0
    %529 = vmatpush1.msra.mxu0 0.0
    %530 = vmatprep.subr.mxu0 0.0
    %531 = vmatpush1.msra.mxu0 0.0
    %532 = vmatprep.subr.mxu0 0.0
    %533 = vmatpush1.msra.mxu0 0.0
    %534 = vmatprep.subr.mxu0 0.0
    %535 = vmatpush1.msra.mxu0 0.0
    %536 = vmatprep.subr.mxu0 0.0
    %537 = vmatpush1.msra.mxu0 0.0
    %538 = vmatprep.subr.mxu0 0.0
    %539 = vmatpush1.msra.mxu0 0.0
    %540 = vmatprep.subr.mxu0 0.0
    %541 = vmatpush1.msra.mxu0 0.0
    %542 = vmatprep.subr.mxu0 0.0
    %543 = vmatpush1.msra.mxu0 0.0
    %544 = vmatprep.subr.mxu0 0.0
    %545 = vmatpush1.msra.mxu0 0.0
    %546 = vmatprep.mubr.f32.mxu0 0.0
    %547 = vmatmul.mubr.f32.gmra.mrb[0].mxu0 %v477
    %v548 = vpop.f32.mrb[0].mxu0
    %v549 = vadd.f32 0.0, %v548
    %v550 = vpop.f32.mrb[0].mxu0
    %551 = vmatprep.mubr.f32.mxu0 0.0
    %552 = vmatmul.mubr.f32.gmra.mrb[0].mxu0 %v480
    %v553 = vpop.f32.mrb[0].mxu0
    %v554 = vadd.f32 0.0, %v553
    %v555 = vpop.f32.mrb[0].mxu0
    %556 = vdwg.mxu0
    %v557 = vadd.f32 %v391, %v549
    %v558 = vadd.f32 %v392, %v554
    %v560 = vsel %vm59, %v557, 0
    %v563 = vsel %vm59, %v558, 0
    %565 = vmatprep.subr.mxu0 0.0
    %566 = vmatpush1.msra.mxu0 %v38
    %567 = vmatprep.subr.mxu0 0.0
    %568 = vmatpush1.msra.mxu0 %v39
    %569 = vmatprep.subr.mxu0 0.0
    %570 = vmatpush1.msra.mxu0 %v40
    %571 = vmatprep.subr.mxu0 0.0
    %572 = vmatpush1.msra.mxu0 %v41
    %573 = vmatprep.subr.mxu0 0.0
    %574 = vmatpush1.msra.mxu0 0.0
    %575 = vmatprep.subr.mxu0 0.0
    %576 = vmatpush1.msra.mxu0 0.0
    %577 = vmatprep.subr.mxu0 0.0
    %578 = vmatpush1.msra.mxu0 0.0
    %579 = vmatprep.subr.mxu0 0.0
    %580 = vmatpush1.msra.mxu0 0.0
    %581 = vmatprep.subr.mxu0 0.0
    %582 = vmatpush1.msra.mxu0 0.0
    %583 = vmatprep.subr.mxu0 0.0
    %584 = vmatpush1.msra.mxu0 0.0
    %585 = vmatprep.subr.mxu0 0.0
    %586 = vmatpush1.msra.mxu0 0.0
    %587 = vmatprep.subr.mxu0 0.0
    %588 = vmatpush1.msra.mxu0 0.0
    %589 = vmatprep.subr.mxu0 0.0
    %590 = vmatpush1.msra.mxu0 0.0
    %591 = vmatprep.subr.mxu0 0.0
    %592 = vmatpush1.msra.mxu0 0.0
    %593 = vmatprep.subr.mxu0 0.0
    %594 = vmatpush1.msra.mxu0 0.0
    %595 = vmatprep.subr.mxu0 0.0
    %596 = vmatpush1.msra.mxu0 0.0
    %597 = vmatprep.subr.mxu0 0.0
    %598 = vmatpush1.msra.mxu0 0.0
    %599 = vmatprep.subr.mxu0 0.0
    %600 = vmatpush1.msra.mxu0 0.0
    %601 = vmatprep.subr.mxu0 0.0
    %602 = vmatpush1.msra.mxu0 0.0
    %603 = vmatprep.subr.mxu0 0.0
    %604 = vmatpush1.msra.mxu0 0.0
    %605 = vmatprep.subr.mxu0 0.0
    %606 = vmatpush1.msra.mxu0 0.0
    %607 = vmatprep.subr.mxu0 0.0
    %608 = vmatpush1.msra.mxu0 0.0
    %609 = vmatprep.subr.mxu0 0.0
    %610 = vmatpush1.msra.mxu0 0.0
    %611 = vmatprep.subr.mxu0 0.0
    %612 = vmatpush1.msra.mxu0 0.0
    %613 = vmatprep.subr.mxu0 0.0
    %614 = vmatpush1.msra.mxu0 0.0
    %615 = vmatprep.subr.mxu0 0.0
    %616 = vmatpush1.msra.mxu0 0.0
    %617 = vmatprep.subr.mxu0 0.0
    %618 = vmatpush1.msra.mxu0 0.0
    %619 = vmatprep.subr.mxu0 0.0
    %620 = vmatpush1.msra.mxu0 0.0
    %621 = vmatprep.subr.mxu0 0.0
    %622 = vmatpush1.msra.mxu0 0.0
    %623 = vmatprep.subr.mxu0 0.0
    %624 = vmatpush1.msra.mxu0 0.0
    %625 = vmatprep.subr.mxu0 0.0
    %626 = vmatpush1.msra.mxu0 0.0
    %627 = vmatprep.subr.mxu0 0.0
    %628 = vmatpush1.msra.mxu0 0.0
    %629 = vmatprep.mubr.f32.mxu0 0.0
    %630 = vmatmul.mubr.f32.gmra.mrb[0].mxu0 %v560
    %v631 = vpop.f32.mrb[0].mxu0
    %v632 = vadd.f32 %v55, %v631
    %v633 = vpop.f32.mrb[0].mxu0
    %634 = vmatprep.mubr.f32.mxu0 0.0
    %635 = vmatmul.mubr.f32.gmra.mrb[0].mxu0 %v563
    %v636 = vpop.f32.mrb[0].mxu0
    %v637 = vadd.f32 %v55, %v636
    %v638 = vpop.f32.mrb[0].mxu0
    %639 = vdwg.mxu0
    %v640 = vmax.f32 %v632, 0.0
    %v641 = vmax.f32 %v637, 0.0
    %v642 = vld [vmem:[%s4] sm:$0xff]
    %v643 = vld [vmem:[%s4 + $0x8] sm:$0xff]
    %v644 = vld [vmem:[%s4 + $0x10] sm:$0xff]
    %v645 = vld [vmem:[%s4 + $0x18] sm:$0xff]
    %v646 = vld [vmem:[%s4 + $0x20] sm:$0xff]
    %v647 = vld [vmem:[%s4 + $0x28] sm:$0xff]
    %v648 = vld [vmem:[%s4 + $0x30] sm:$0xff]
    %v649 = vld [vmem:[%s4 + $0x38] sm:$0xff]
    %v650 = vld [vmem:[%s5] sm:$0x1]
    %v652 = vlaneseq
    %v653 = vshrl.u32 %v652, 7
    %v654 = vsub.s32 0, %v653
    %v655 = vrot.slane %v650, %v654
    %v658 = vsel %vm143, %v640, 0
    %v661 = vsel %vm143, %v641, 0
    %663 = vmatprep.subr.mxu0 0.0
    %664 = vmatpush1.msra.mxu0 %v642
    %665 = vmatprep.subr.mxu0 0.0
    %666 = vmatpush1.msra.mxu0 %v643
    %667 = vmatprep.subr.mxu0 0.0
    %668 = vmatpush1.msra.mxu0 %v644
    %669 = vmatprep.subr.mxu0 0.0
    %670 = vmatpush1.msra.mxu0 %v645
    %671 = vmatprep.subr.mxu0 0.0
    %672 = vmatpush1.msra.mxu0 %v646
    %673 = vmatprep.subr.mxu0 0.0
    %674 = vmatpush1.msra.mxu0 %v647
    %675 = vmatprep.subr.mxu0 0.0
    %676 = vmatpush1.msra.mxu0 %v648
    %677 = vmatprep.subr.mxu0 0.0
    %678 = vmatpush1.msra.mxu0 %v649
    %679 = vmatprep.subr.mxu0 0.0
    %680 = vmatpush1.msra.mxu0 0.0
    %681 = vmatprep.subr.mxu0 0.0
    %682 = vmatpush1.msra.mxu0 0.0
    %683 = vmatprep.subr.mxu0 0.0
    %684 = vmatpush1.msra.mxu0 0.0
    %685 = vmatprep.subr.mxu0 0.0
    %686 = vmatpush1.msra.mxu0 0.0
    %687 = vmatprep.subr.mxu0 0.0
    %688 = vmatpush1.msra.mxu0 0.0
    %689 = vmatprep.subr.mxu0 0.0
    %690 = vmatpush1.msra.mxu0 0.0
    %691 = vmatprep.subr.mxu0 0.0
    %692 = vmatpush1.msra.mxu0 0.0
    %693 = vmatprep.subr.mxu0 0.0
    %694 = vmatpush1.msra.mxu0 0.0
    %695 = vmatprep.subr.mxu0 0.0
    %696 = vmatpush1.msra.mxu0 0.0
    %697 = vmatprep.subr.mxu0 0.0
    %698 = vmatpush1.msra.mxu0 0.0
    %699 = vmatprep.subr.mxu0 0.0
    %700 = vmatpush1.msra.mxu0 0.0
    %701 = vmatprep.subr.mxu0 0.0
    %702 = vmatpush1.msra.mxu0 0.0
    %703 = vmatprep.subr.mxu0 0.0
    %704 = vmatpush1.msra.mxu0 0.0
    %705 = vmatprep.subr.mxu0 0.0
    %706 = vmatpush1.msra.mxu0 0.0
    %707 = vmatprep.subr.mxu0 0.0
    %708 = vmatpush1.msra.mxu0 0.0
    %709 = vmatprep.subr.mxu0 0.0
    %710 = vmatpush1.msra.mxu0 0.0
    %711 = vmatprep.subr.mxu0 0.0
    %712 = vmatpush1.msra.mxu0 0.0
    %713 = vmatprep.subr.mxu0 0.0
    %714 = vmatpush1.msra.mxu0 0.0
    %715 = vmatprep.subr.mxu0 0.0
    %716 = vmatpush1.msra.mxu0 0.0
    %717 = vmatprep.subr.mxu0 0.0
    %718 = vmatpush1.msra.mxu0 0.0
    %719 = vmatprep.subr.mxu0 0.0
    %720 = vmatpush1.msra.mxu0 0.0
    %721 = vmatprep.subr.mxu0 0.0
    %722 = vmatpush1.msra.mxu0 0.0
    %723 = vmatprep.subr.mxu0 0.0
    %724 = vmatpush1.msra.mxu0 0.0
    %725 = vmatprep.subr.mxu0 0.0
    %726 = vmatpush1.msra.mxu0 0.0
    %727 = vmatprep.mubr.f32.mxu0 0.0
    %728 = vmatmul.mubr.f32.gmra.mrb[0].mxu0 %v658
    %v729 = vpop.f32.mrb[0].mxu0
    %v730 = vadd.f32 %v655, %v729
    %v731 = vpop.f32.mrb[0].mxu0
    %732 = vmatprep.mubr.f32.mxu0 0.0
    %733 = vmatmul.mubr.f32.gmra.mrb[0].mxu0 %v661
    %v734 = vpop.f32.mrb[0].mxu0
    %v735 = vadd.f32 %v655, %v734
    %v736 = vpop.f32.mrb[0].mxu0
    %737 = vdwg.mxu0
    %738 = vst [vmem:[#allocation5] sm:$0xff] %v730
    %739 = vst [vmem:[#allocation5 + $0x8] sm:$0xff] %v735
    // Predicated region
    $region30: #{tpu_custom_call.1} parent=1 // pred_check
      _
    $region31: #{tpu_custom_call.1} parent=1 // pred_check_branch
      %741 = sbr.rel (0) target = $region33
    $region32: #{tpu_custom_call.1} parent=1 // pred_region
      %s743 = ssub.s32 256, 256
      %744 = vsyncadd [#allocation4], %s743
      %s745 = sshll.u32 [#allocation5], 4
      %s746 = int_to_ptr.vmem [resolvable:$true] %s745
      %751 = dma.vmem_to_hbm [thread:$0]  %s746, 256, %s6, [#allocation4], 128, 128, 8
    $region33: #{tpu_custom_call.1} parent=1 // pred_fallthru
      _
    // Predicated region
    $region34: #{tpu_custom_call.1} parent=1 // pred_check
      _
    $region35: #{tpu_custom_call.1} parent=1 // pred_check_branch
      %753 = sbr.rel (0) target = $region37
    $region36: #{tpu_custom_call.1} parent=1 // pred_region
      %754 = dma.done [#allocation4], 256
    $region37: #{tpu_custom_call.1} parent=1 // pred_fallthru
      _
    %755 = vsyncpa [#allocation3], 1
    %756 = vsyncpa [#allocation4], 1

</llo_original>
